<compile_context>
chip_gen: v6e
topology: v6e:2x2x1
jax: 0.10.0
libtpu: 0.0.40
codegen_flags: <defaults>
</compile_context>

<pallas_src>
import jax
import jax.numpy as jnp
from jax.experimental import pallas as pl
from jax.experimental.pallas import tpu as pltpu

_MIB = 1024 * 1024


def _round_up(x, m):
    return ((x + m - 1) // m) * m


# ---------------------------------------------------------------------------
# Kernels
# ---------------------------------------------------------------------------

def _fused_small_kernel(x_ref, wenc_ref, benc_ref, wlin_ref, blin_ref, out_ref):
    """Gridless fast path: encoder GEMM + linear head + softmax, all resident.

    x_ref:    (B_pad, D_pad) bf16
    wenc_ref: (D_pad, E)     bf16
    benc_ref: (1, E)  f32 ; wlin_ref: (E, N) f32 ; blin_ref: (1, N) f32
    out_ref:  (B_pad, N) f32 softmax probabilities
    """
    h = jnp.dot(x_ref[...], wenc_ref[...], preferred_element_type=jnp.float32)
    h = h + benc_ref[...]
    logits = jnp.dot(h, wlin_ref[...],
                     preferred_element_type=jnp.float32) + blin_ref[...]
    m = jnp.max(logits, axis=1, keepdims=True)
    e = jnp.exp(logits - m)
    # runs once per call -> exact normalization is essentially free
    out_ref[...] = e / jnp.sum(e, axis=1, keepdims=True)


def _encoder_stream_kernel(x_ref, wenc_ref, h_ref):
    """Streamed encoder GEMM for large D.

    grid = (n_e [parallel], n_k [arbitrary, reduction]).
    The f32 output block (B_pad, e_block) keeps the same block index across
    the k axis, so it stays resident in VMEM and acts as the accumulator.
    """
    k = pl.program_id(1)

    @pl.when(k == 0)
    def _():
        h_ref[...] = jnp.zeros_like(h_ref)

    h_ref[...] += jnp.dot(x_ref[...], wenc_ref[...],
                          preferred_element_type=jnp.float32)


def _head_softmax_kernel(h_ref, benc_ref, wlin_ref, blin_ref, out_ref):
    """Tiny head: bias + nn.Linear + softmax(dim=1), gridless / resident."""
    h = h_ref[...] + benc_ref[...]
    logits = jnp.dot(h, wlin_ref[...],
                     preferred_element_type=jnp.float32) + blin_ref[...]
    m = jnp.max(logits, axis=1, keepdims=True)
    e = jnp.exp(logits - m)
    out_ref[...] = e / jnp.sum(e, axis=1, keepdims=True)


# ---------------------------------------------------------------------------
# One-time parameter preparation (hoisted out of the per-call forward)
# ---------------------------------------------------------------------------

def prepare_second_cnn_params(w_enc, b_enc, w_lin, b_lin, input_shape,
                              *, fast_path_max_bytes=16 * _MIB,
                              tile_bytes_target=2 * _MIB):
    """Casts/pads/transposes parameters once and derives the tiling config.

    w_enc: (D, E) stand-in first_model projection, f32
    b_enc: (E,)   stand-in first_model bias
    w_lin: (N, E) torch nn.Linear weight layout
    b_lin: (N,)   nn.Linear bias
    input_shape: (B, C, H, W) example input shape (D = C*H*W)
    """
    B = int(input_shape[0])
    D = 1
    for s in input_shape[1:]:
        D *= int(s)
    E = int(w_enc.shape[1])
    N = int(w_lin.shape[0])
    assert w_enc.shape == (D, E)
    assert w_lin.shape == (N, E)
    assert E % 128 == 0, "embedding_dim assumed lane-aligned (multiple of 128)"

    # bf16 packs 16 rows per sublane group -> pad batch to 16
    B_pad = max(16, _round_up(B, 16))

    # head parameters: tiny, kept f32, fully resident
    b_enc_p = jnp.asarray(b_enc, jnp.float32).reshape(1, E)
    w_lin_p = jnp.asarray(w_lin, jnp.float32).T.reshape(E, N)   # (E, N)
    b_lin_p = jnp.asarray(b_lin, jnp.float32).reshape(1, N)

    # split E into 2 parallel column blocks (v7x dual-TensorCore) when possible
    e_block = E // 2 if (E % 256 == 0) else E
    n_e = E // e_block

    # reduction tile: target ~tile_bytes_target of W_enc per buffer so the
    # ~0.35us per-grid-step overhead is well amortized; minimize D padding.
    tk_target = max(512, min(16384,
                             (tile_bytes_target // (e_block * 2)) // 512 * 512))
    D512 = _round_up(D, 512)
    n_k = max(1, -(-D512 // tk_target))
    tk = _round_up(-(-D512 // n_k), 512)
    D_pad = n_k * tk

    # fast path when the streamed operands fit comfortably in VMEM
    streamed_bytes = B_pad * D_pad * 2 + D_pad * E * 2
    use_fast_path = streamed_bytes <= fast_path_max_bytes

    # bf16 weight stream, padded along D ONCE here (zero padding is inert
    # in the accumulation) -- not per forward call.
    w_enc_bf = jnp.asarray(w_enc, jnp.bfloat16)
    if D_pad != D:
        w_enc_bf = jnp.pad(w_enc_bf, ((0, D_pad - D), (0, 0)))

    cfg = dict(B=B, D=D, E=E, N=N, B_pad=B_pad, D_pad=D_pad,
               tk=tk, n_k=n_k, e_block=e_block, n_e=n_e,
               use_fast_path=use_fast_path)
    params = dict(w_enc_bf=w_enc_bf, b_enc=b_enc_p,
                  w_lin=w_lin_p, b_lin=b_lin_p)
    return params, cfg


# ---------------------------------------------------------------------------
# Forward builder
# ---------------------------------------------------------------------------

def make_second_cnn_forward(params, cfg):
    B, D = cfg["B"], cfg["D"]
    B_pad, D_pad = cfg["B_pad"], cfg["D_pad"]
    E, N = cfg["E"], cfg["N"]
    tk, n_k = cfg["tk"], cfg["n_k"]
    e_block, n_e = cfg["e_block"], cfg["n_e"]

    vmem = pltpu.MemorySpace.VMEM

    if cfg["use_fast_path"]:
        resident_bytes = (B_pad * D_pad * 2 + D_pad * E * 2
                          + E * 128 * 4 + 4 * E + 4 * 128 + B_pad * 128 * 4)
        vmem_limit = int(min(48 * _MIB, max(32 * _MIB, resident_bytes + 8 * _MIB)))
        fused = pl.pallas_call(
            _fused_small_kernel,
            out_shape=jax.ShapeDtypeStruct((B_pad, N), jnp.float32),
            in_specs=[pl.BlockSpec(memory_space=vmem)] * 5,
            out_specs=pl.BlockSpec(memory_space=vmem),
            compiler_params=pltpu.CompilerParams(vmem_limit_bytes=vmem_limit),
        )

        @jax.jit
        def _fwd(x, w_enc_bf, b_enc, w_lin, b_lin):
            xb = x.reshape(x.shape[0], -1).astype(jnp.bfloat16)
            xb = jnp.pad(xb, ((0, B_pad - x.shape[0]), (0, D_pad - D)))
            out = fused(xb, w_enc_bf, b_enc, w_lin, b_lin)
            return out[:B]

    else:
        # streamed encoder GEMM over grid (e [parallel], k [reduction])
        enc_vmem = (2 * (B_pad * tk * 2)            # x tiles, double-buffered
                    + 2 * (tk * e_block * 2)        # W_enc tiles
                    + 2 * (B_pad * e_block * 4))    # resident output/accumulator
        vmem_limit = int(min(48 * _MIB, max(32 * _MIB, 2 * enc_vmem)))
        encoder = pl.pallas_call(
            _encoder_stream_kernel,
            out_shape=jax.ShapeDtypeStruct((B_pad, E), jnp.float32),
            grid=(n_e, n_k),
            in_specs=[
                pl.BlockSpec((B_pad, tk), lambda e, k: (0, k)),    # x tile
                pl.BlockSpec((tk, e_block), lambda e, k: (k, e)),  # W_enc tile
            ],
            out_specs=pl.BlockSpec((B_pad, e_block), lambda e, k: (0, e)),
            compiler_params=pltpu.CompilerParams(
                dimension_semantics=("parallel", "arbitrary"),
                vmem_limit_bytes=vmem_limit,
            ),
        )
        head = pl.pallas_call(
            _head_softmax_kernel,
            out_shape=jax.ShapeDtypeStruct((B_pad, N), jnp.float32),
            in_specs=[pl.BlockSpec(memory_space=vmem)] * 4,
            out_specs=pl.BlockSpec(memory_space=vmem),
            compiler_params=pltpu.CompilerParams(vmem_limit_bytes=32 * _MIB),
        )

        @jax.jit
        def _fwd(x, w_enc_bf, b_enc, w_lin, b_lin):
            xb = x.reshape(x.shape[0], -1).astype(jnp.bfloat16)
            xb = jnp.pad(xb, ((0, B_pad - x.shape[0]), (0, D_pad - D)))
            h = encoder(xb, w_enc_bf)
            out = head(h, b_enc, w_lin, b_lin)
            return out[:B]

    def forward(x):
        return _fwd(x, params["w_enc_bf"], params["b_enc"],
                    params["w_lin"], params["b_lin"])

    return forward


# ---------------------------------------------------------------------------
# Demo / self-test
# ---------------------------------------------------------------------------

if __name__ == "__main__":
    B, C, H, W = 2, 4, 16, 16
    embedding_dim = 256
    noutputs = 4
    D = C * H * W

    key = jax.random.PRNGKey(0)
    kx, ke, kbe, kl, kbl = jax.random.split(key, 5)

    x = jax.random.normal(kx, (B, C, H, W), dtype=jnp.float32)
    w_enc = (jax.random.normal(ke, (D, embedding_dim), dtype=jnp.float32)
             * (1.0 / jnp.sqrt(D * 1.0)))
    b_enc = jax.random.normal(kbe, (embedding_dim,), dtype=jnp.float32) * 0.01
    w_lin = (jax.random.normal(kl, (noutputs, embedding_dim), dtype=jnp.float32)
             * (1.0 / jnp.sqrt(embedding_dim * 1.0)))
    b_lin = jax.random.normal(kbl, (noutputs,), dtype=jnp.float32) * 0.01

    # pure-JAX reference, using the same bf16-quantized streamed operands
    x_q = x.reshape(B, -1).astype(jnp.bfloat16).astype(jnp.float32)
    w_q = w_enc.astype(jnp.bfloat16).astype(jnp.float32)
    h_ref = x_q @ w_q + b_enc[None, :]
    logits_ref = h_ref @ w_lin.T + b_lin[None, :]
    ref = jax.nn.softmax(logits_ref, axis=1)

    # 1) default config -> gridless fully-fused fast path
    params, cfg = prepare_second_cnn_params(
        w_enc, b_enc, w_lin, b_lin, (B, C, H, W))
    assert cfg["use_fast_path"]
    fwd_fast = make_second_cnn_forward(params, cfg)
    out_fast = jax.block_until_ready(fwd_fast(x))

    # 2) force the streamed, two-parallel-column-block grid path (exercises
    #    the large-D code path with small shapes: n_e=2 parallel, n_k=2 reduction)
    params_g, cfg_g = prepare_second_cnn_params(
        w_enc, b_enc, w_lin, b_lin, (B, C, H, W),
        fast_path_max_bytes=0, tile_bytes_target=128 * 1024)
    assert (not cfg_g["use_fast_path"]) and cfg_g["n_k"] > 1 and cfg_g["n_e"] == 2
    fwd_grid = make_second_cnn_forward(params_g, cfg_g)
    out_grid = jax.block_until_ready(fwd_grid(x))

    for out in (out_fast, out_grid):
        assert out.shape == (B, noutputs)
        assert jnp.allclose(jnp.sum(out, axis=1), 1.0, atol=1e-4)
        assert jnp.allclose(out, ref, atol=3e-3, rtol=3e-3)
    assert jnp.allclose(out_fast, out_grid, atol=1e-4, rtol=1e-4)

    print("KERNEL_OK")
</pallas_src>

<mosaic_0001>
module attributes {stable_mosaic.version = 11 : i64} {
  func.func @_fused_small_kernel(%arg0: memref<16x1024xbf16, #tpu.memory_space<vmem>>, %arg1: memref<1024x256xbf16, #tpu.memory_space<vmem>>, %arg2: memref<1x256xf32, #tpu.memory_space<vmem>>, %arg3: memref<256x4xf32, #tpu.memory_space<vmem>>, %arg4: memref<1x4xf32, #tpu.memory_space<vmem>>, %arg5: memref<16x4xf32, #tpu.memory_space<vmem>>) attributes {dimension_semantics = [], scalar_prefetch = 0 : i64, scratch_operands = 0 : i64, tpu.core_type = #tpu.core_type<tc>} {
    %c0 = arith.constant 0 : index
    %c0_0 = arith.constant 0 : index
    %0 = vector.load %arg0[%c0, %c0_0] : memref<16x1024xbf16, #tpu.memory_space<vmem>>, vector<16x1024xbf16>
    %c0_1 = arith.constant 0 : index
    %c0_2 = arith.constant 0 : index
    %1 = vector.load %arg1[%c0_1, %c0_2] : memref<1024x256xbf16, #tpu.memory_space<vmem>>, vector<1024x256xbf16>
    %cst = arith.constant dense<0.000000e+00> : vector<16x256xf32>
    %2 = tpu.matmul %0, %1, %cst {dimension_numbers = #tpu.dot_dimension_numbers<[1], [0], [0], [1], [0, 0, 1, 1], [], []>} : vector<16x1024xbf16>, vector<1024x256xbf16>, vector<16x256xf32> -> vector<16x256xf32>
    %c0_3 = arith.constant 0 : index
    %c0_4 = arith.constant 0 : index
    %3 = vector.load %arg2[%c0_3, %c0_4] : memref<1x256xf32, #tpu.memory_space<vmem>>, vector<1x256xf32>
    %4 = vector.broadcast %3 : vector<1x256xf32> to vector<16x256xf32>
    %5 = arith.addf %2, %4 : vector<16x256xf32>
    %c0_5 = arith.constant 0 : index
    %c0_6 = arith.constant 0 : index
    %6 = vector.load %arg3[%c0_5, %c0_6] : memref<256x4xf32, #tpu.memory_space<vmem>>, vector<256x4xf32>
    %cst_7 = arith.constant dense<0.000000e+00> : vector<16x4xf32>
    %7 = tpu.matmul %5, %6, %cst_7 {dimension_numbers = #tpu.dot_dimension_numbers<[1], [0], [0], [1], [0, 0, 1, 1], [], []>} : vector<16x256xf32>, vector<256x4xf32>, vector<16x4xf32> -> vector<16x4xf32>
    %c0_8 = arith.constant 0 : index
    %c0_9 = arith.constant 0 : index
    %8 = vector.load %arg4[%c0_8, %c0_9] : memref<1x4xf32, #tpu.memory_space<vmem>>, vector<1x4xf32>
    %9 = vector.broadcast %8 : vector<1x4xf32> to vector<16x4xf32>
    %10 = arith.addf %7, %9 : vector<16x4xf32>
    %cst_10 = arith.constant dense<0xFF800000> : vector<16xf32>
    %11 = vector.multi_reduction <maximumf>, %10, %cst_10 [1] : vector<16x4xf32> to vector<16xf32>
    %12 = vector.shape_cast %11 : vector<16xf32> to vector<16x1xf32>
    %13 = vector.broadcast %12 : vector<16x1xf32> to vector<16x4xf32>
    %14 = arith.subf %10, %13 : vector<16x4xf32>
    %15 = math.exp %14 : vector<16x4xf32>
    %cst_11 = arith.constant dense<0.000000e+00> : vector<16xf32>
    %16 = vector.multi_reduction <add>, %15, %cst_11 [1] : vector<16x4xf32> to vector<16xf32>
    %17 = vector.shape_cast %16 : vector<16xf32> to vector<16x1xf32>
    %18 = vector.broadcast %17 : vector<16x1xf32> to vector<16x4xf32>
    %19 = arith.divf %15, %18 : vector<16x4xf32>
    %c0_12 = arith.constant 0 : index
    %c0_13 = arith.constant 0 : index
    %20 = vector.load %arg5[%c0_12, %c0_13] : memref<16x4xf32, #tpu.memory_space<vmem>>, vector<16x4xf32>
    tpu.vector_store %arg5[%c0_12, %c0_13], %19 {strides = array<i32>} : memref<16x4xf32, #tpu.memory_space<vmem>>, vector<16x4xf32>,
    return
  }
}

</mosaic_0001>

<llo_original>
// kernel: _fwd.1
$region0: #{_fwd.1}
  #allocation0 [shape = 'u32[]', space=smem, size = 0x4, offset = 0x4, fixed_abs, tag = 'smem constant byte address 0x4 - core index']
  #allocation1 [shape = 'u32[144,128]{1,0:T(1,128)}', space=vmem, size = 0x12000, scoped, tag = 'internal scratch']
  %s0 = inlined_call_operand.vmem [shape: bf16[16,1024], index: 0, kind: input, shape index: {}]
  %s1 = inlined_call_operand.hbm [shape: bf16[1024,256], index: 1, kind: input, shape index: {}]
  %s2 = inlined_call_operand.vmem [shape: f32[1,256], index: 2, kind: input, shape index: {}]
  %s3 = inlined_call_operand.vmem [shape: f32[256,4], index: 3, kind: input, shape index: {}]
  %s4 = inlined_call_operand.vmem [shape: f32[1,4], index: 4, kind: input, shape index: {}]
  %s5 = inlined_call_operand.vmem [shape: f32[16,4], index: 5, kind: output, shape index: {}]
  %s6 = sld [smem:[#allocation0]]
  $region34: #{_fwd.1} parent=0
    _
  %s8 = ssub.s32 1, %s6
  %s9 = scalar_select 0, %s8, %s6
  $region1: #{_fwd.1} parent=0
    #allocation2 [shape = 'u8[524288]{0}', space=vmem, size = 0x80000, scoped, tag = 'input window, operand 1, single buffered']
    #allocation3 [shape = 's32[1]{0}', space=sflag, size = 0x4, scoped, tag = 'scoped memory for _fwd.1']
    %10 = vsyncpa [#allocation3], 0
    // Predicated region
    $region2: #{_fwd.1} parent=1 // pred_check
      _
    $region3: #{_fwd.1} parent=1 // pred_check_branch
      %12 = sbr.rel (0) target = $region5
    $region4: #{_fwd.1} parent=1 // pred_region
      _
    $region5: #{_fwd.1} parent=1 // pred_fallthru
      _
    // Predicated region
    $region6: #{_fwd.1} parent=1 // pred_check
      _
    $region7: #{_fwd.1} parent=1 // pred_check_branch
      %14 = sbr.rel (0) target = $region9
    $region8: #{_fwd.1} parent=1 // pred_region
      %s16 = ssub.s32 16384, 16384
      %17 = vsyncadd [#allocation3], %s16
      %s18 = sshll.u32 [#allocation2], 4
      %s19 = int_to_ptr.vmem [resolvable:$true] %s18
      %24 = dma.hbm_to_vmem [thread:$0]  %s1, 16384, %s19, [#allocation3], 128, 128, 8
    $region9: #{_fwd.1} parent=1 // pred_fallthru
      _
    // Predicated region
    $region10: #{_fwd.1} parent=1 // pred_check
      _
    $region11: #{_fwd.1} parent=1 // pred_check_branch
      %26 = sbr.rel (0) target = $region13
    $region12: #{_fwd.1} parent=1 // pred_region
      _
    $region13: #{_fwd.1} parent=1 // pred_fallthru
      _
    // Predicated region
    $region14: #{_fwd.1} parent=1 // pred_check
      _
    $region15: #{_fwd.1} parent=1 // pred_check_branch
      %28 = sbr.rel (0) target = $region17
    $region16: #{_fwd.1} parent=1 // pred_region
      _
    $region17: #{_fwd.1} parent=1 // pred_fallthru
      _
    // Predicated region
    $region18: #{_fwd.1} parent=1 // pred_check
      _
    $region19: #{_fwd.1} parent=1 // pred_check_branch
      %30 = sbr.rel (0) target = $region21
    $region20: #{_fwd.1} parent=1 // pred_region
      _
    $region21: #{_fwd.1} parent=1 // pred_fallthru
      _
    // Predicated region
    $region22: #{_fwd.1} parent=1 // pred_check
      _
    $region23: #{_fwd.1} parent=1 // pred_check_branch
      %32 = sbr.rel (0) target = $region25
    $region24: #{_fwd.1} parent=1 // pred_region
      %33 = dma.done [#allocation3], 16384
    $region25: #{_fwd.1} parent=1 // pred_fallthru
      _
    %v34 = vld [vmem:[%s0] sm:$0xff]
    %v35 = vld [vmem:[%s0 + $0x8] sm:$0xff]
    %v36 = vld [vmem:[%s0 + $0x10] sm:$0xff]
    %v37 = vld [vmem:[%s0 + $0x18] sm:$0xff]
    %v38 = vld [vmem:[%s0 + $0x20] sm:$0xff]
    %v39 = vld [vmem:[%s0 + $0x28] sm:$0xff]
    %v40 = vld [vmem:[%s0 + $0x30] sm:$0xff]
    %v41 = vld [vmem:[%s0 + $0x38] sm:$0xff]
    %v42 = vld [vmem:[#allocation2] sm:$0xff]
    %v43 = vld [vmem:[#allocation2 + $0x8] sm:$0xff]
    %v44 = vld [vmem:[#allocation2 + $0x10] sm:$0xff]
    %v45 = vld [vmem:[#allocation2 + $0x18] sm:$0xff]
    %v46 = vld [vmem:[#allocation2 + $0x20] sm:$0xff]
    %v47 = vld [vmem:[#allocation2 + $0x28] sm:$0xff]
    %v48 = vld [vmem:[#allocation2 + $0x30] sm:$0xff]
    %v49 = vld [vmem:[#allocation2 + $0x38] sm:$0xff]
    %v50 = vld [vmem:[#allocation2 + $0x40] sm:$0xff]
    %v51 = vld [vmem:[#allocation2 + $0x48] sm:$0xff]
    %v52 = vld [vmem:[#allocation2 + $0x50] sm:$0xff]
    %v53 = vld [vmem:[#allocation2 + $0x58] sm:$0xff]
    %v54 = vld [vmem:[#allocation2 + $0x60] sm:$0xff]
    %v55 = vld [vmem:[#allocation2 + $0x68] sm:$0xff]
    %v56 = vld [vmem:[#allocation2 + $0x70] sm:$0xff]
    %v57 = vld [vmem:[#allocation2 + $0x78] sm:$0xff]
    %v58 = vld [vmem:[#allocation2 + $0x80] sm:$0xff]
    %v59 = vld [vmem:[#allocation2 + $0x88] sm:$0xff]
    %v60 = vld [vmem:[#allocation2 + $0x90] sm:$0xff]
    %v61 = vld [vmem:[#allocation2 + $0x98] sm:$0xff]
    %v62 = vld [vmem:[#allocation2 + $0xa0] sm:$0xff]
    %v63 = vld [vmem:[#allocation2 + $0xa8] sm:$0xff]
    %v64 = vld [vmem:[#allocation2 + $0xb0] sm:$0xff]
    %v65 = vld [vmem:[#allocation2 + $0xb8] sm:$0xff]
    %v66 = vld [vmem:[#allocation2 + $0xc0] sm:$0xff]
    %v67 = vld [vmem:[#allocation2 + $0xc8] sm:$0xff]
    %v68 = vld [vmem:[#allocation2 + $0xd0] sm:$0xff]
    %v69 = vld [vmem:[#allocation2 + $0xd8] sm:$0xff]
    %v70 = vld [vmem:[#allocation2 + $0xe0] sm:$0xff]
    %v71 = vld [vmem:[#allocation2 + $0xe8] sm:$0xff]
    %v72 = vld [vmem:[#allocation2 + $0xf0] sm:$0xff]
    %v73 = vld [vmem:[#allocation2 + $0xf8] sm:$0xff]
    %v74 = vld [vmem:[#allocation2 + $0x100] sm:$0xff]
    %v75 = vld [vmem:[#allocation2 + $0x108] sm:$0xff]
    %v76 = vld [vmem:[#allocation2 + $0x110] sm:$0xff]
    %v77 = vld [vmem:[#allocation2 + $0x118] sm:$0xff]
    %v78 = vld [vmem:[#allocation2 + $0x120] sm:$0xff]
    %v79 = vld [vmem:[#allocation2 + $0x128] sm:$0xff]
    %v80 = vld [vmem:[#allocation2 + $0x130] sm:$0xff]
    %v81 = vld [vmem:[#allocation2 + $0x138] sm:$0xff]
    %v82 = vld [vmem:[#allocation2 + $0x140] sm:$0xff]
    %v83 = vld [vmem:[#allocation2 + $0x148] sm:$0xff]
    %v84 = vld [vmem:[#allocation2 + $0x150] sm:$0xff]
    %v85 = vld [vmem:[#allocation2 + $0x158] sm:$0xff]
    %v86 = vld [vmem:[#allocation2 + $0x160] sm:$0xff]
    %v87 = vld [vmem:[#allocation2 + $0x168] sm:$0xff]
    %v88 = vld [vmem:[#allocation2 + $0x170] sm:$0xff]
    %v89 = vld [vmem:[#allocation2 + $0x178] sm:$0xff]
    %v90 = vld [vmem:[#allocation2 + $0x180] sm:$0xff]
    %v91 = vld [vmem:[#allocation2 + $0x188] sm:$0xff]
    %v92 = vld [vmem:[#allocation2 + $0x190] sm:$0xff]
    %v93 = vld [vmem:[#allocation2 + $0x198] sm:$0xff]
    %v94 = vld [vmem:[#allocation2 + $0x1a0] sm:$0xff]
    %v95 = vld [vmem:[#allocation2 + $0x1a8] sm:$0xff]
    %v96 = vld [vmem:[#allocation2 + $0x1b0] sm:$0xff]
    %v97 = vld [vmem:[#allocation2 + $0x1b8] sm:$0xff]
    %v98 = vld [vmem:[#allocation2 + $0x1c0] sm:$0xff]
    %v99 = vld [vmem:[#allocation2 + $0x1c8] sm:$0xff]
    %v100 = vld [vmem:[#allocation2 + $0x1d0] sm:$0xff]
    %v101 = vld [vmem:[#allocation2 + $0x1d8] sm:$0xff]
    %v102 = vld [vmem:[#allocation2 + $0x1e0] sm:$0xff]
    %v103 = vld [vmem:[#allocation2 + $0x1e8] sm:$0xff]
    %v104 = vld [vmem:[#allocation2 + $0x1f0] sm:$0xff]
    %v105 = vld [vmem:[#allocation2 + $0x1f8] sm:$0xff]
    %v106 = vld [vmem:[#allocation2 + $0x200] sm:$0xff]
    %v107 = vld [vmem:[#allocation2 + $0x208] sm:$0xff]
    %v108 = vld [vmem:[#allocation2 + $0x210] sm:$0xff]
    %v109 = vld [vmem:[#allocation2 + $0x218] sm:$0xff]
    %v110 = vld [vmem:[#allocation2 + $0x220] sm:$0xff]
    %v111 = vld [vmem:[#allocation2 + $0x228] sm:$0xff]
    %v112 = vld [vmem:[#allocation2 + $0x230] sm:$0xff]
    %v113 = vld [vmem:[#allocation2 + $0x238] sm:$0xff]
    %v114 = vld [vmem:[#allocation2 + $0x240] sm:$0xff]
    %v115 = vld [vmem:[#allocation2 + $0x248] sm:$0xff]
    %v116 = vld [vmem:[#allocation2 + $0x250] sm:$0xff]
    %v117 = vld [vmem:[#allocation2 + $0x258] sm:$0xff]
    %v118 = vld [vmem:[#allocation2 + $0x260] sm:$0xff]
    %v119 = vld [vmem:[#allocation2 + $0x268] sm:$0xff]
    %v120 = vld [vmem:[#allocation2 + $0x270] sm:$0xff]
    %v121 = vld [vmem:[#allocation2 + $0x278] sm:$0xff]
    %v122 = vld [vmem:[#allocation2 + $0x280] sm:$0xff]
    %v123 = vld [vmem:[#allocation2 + $0x288] sm:$0xff]
    %v124 = vld [vmem:[#allocation2 + $0x290] sm:$0xff]
    %v125 = vld [vmem:[#allocation2 + $0x298] sm:$0xff]
    %v126 = vld [vmem:[#allocation2 + $0x2a0] sm:$0xff]
    %v127 = vld [vmem:[#allocation2 + $0x2a8] sm:$0xff]
    %v128 = vld [vmem:[#allocation2 + $0x2b0] sm:$0xff]
    %v129 = vld [vmem:[#allocation2 + $0x2b8] sm:$0xff]
    %v130 = vld [vmem:[#allocation2 + $0x2c0] sm:$0xff]
    %v131 = vld [vmem:[#allocation2 + $0x2c8] sm:$0xff]
    %v132 = vld [vmem:[#allocation2 + $0x2d0] sm:$0xff]
    %v133 = vld [vmem:[#allocation2 + $0x2d8] sm:$0xff]
    %v134 = vld [vmem:[#allocation2 + $0x2e0] sm:$0xff]
    %v135 = vld [vmem:[#allocation2 + $0x2e8] sm:$0xff]
    %v136 = vld [vmem:[#allocation2 + $0x2f0] sm:$0xff]
    %v137 = vld [vmem:[#allocation2 + $0x2f8] sm:$0xff]
    %v138 = vld [vmem:[#allocation2 + $0x300] sm:$0xff]
    %v139 = vld [vmem:[#allocation2 + $0x308] sm:$0xff]
    %v140 = vld [vmem:[#allocation2 + $0x310] sm:$0xff]
    %v141 = vld [vmem:[#allocation2 + $0x318] sm:$0xff]
    %v142 = vld [vmem:[#allocation2 + $0x320] sm:$0xff]
    %v143 = vld [vmem:[#allocation2 + $0x328] sm:$0xff]
    %v144 = vld [vmem:[#allocation2 + $0x330] sm:$0xff]
    %v145 = vld [vmem:[#allocation2 + $0x338] sm:$0xff]
    %v146 = vld [vmem:[#allocation2 + $0x340] sm:$0xff]
    %v147 = vld [vmem:[#allocation2 + $0x348] sm:$0xff]
    %v148 = vld [vmem:[#allocation2 + $0x350] sm:$0xff]
    %v149 = vld [vmem:[#allocation2 + $0x358] sm:$0xff]
    %v150 = vld [vmem:[#allocation2 + $0x360] sm:$0xff]
    %v151 = vld [vmem:[#allocation2 + $0x368] sm:$0xff]
    %v152 = vld [vmem:[#allocation2 + $0x370] sm:$0xff]
    %v153 = vld [vmem:[#allocation2 + $0x378] sm:$0xff]
    %v154 = vld [vmem:[#allocation2 + $0x380] sm:$0xff]
    %v155 = vld [vmem:[#allocation2 + $0x388] sm:$0xff]
    %v156 = vld [vmem:[#allocation2 + $0x390] sm:$0xff]
    %v157 = vld [vmem:[#allocation2 + $0x398] sm:$0xff]
    %v158 = vld [vmem:[#allocation2 + $0x3a0] sm:$0xff]
    %v159 = vld [vmem:[#allocation2 + $0x3a8] sm:$0xff]
    %v160 = vld [vmem:[#allocation2 + $0x3b0] sm:$0xff]
    %v161 = vld [vmem:[#allocation2 + $0x3b8] sm:$0xff]
    %v162 = vld [vmem:[#allocation2 + $0x3c0] sm:$0xff]
    %v163 = vld [vmem:[#allocation2 + $0x3c8] sm:$0xff]
    %v164 = vld [vmem:[#allocation2 + $0x3d0] sm:$0xff]
    %v165 = vld [vmem:[#allocation2 + $0x3d8] sm:$0xff]
    %v166 = vld [vmem:[#allocation2 + $0x3e0] sm:$0xff]
    %v167 = vld [vmem:[#allocation2 + $0x3e8] sm:$0xff]
    %v168 = vld [vmem:[#allocation2 + $0x3f0] sm:$0xff]
    %v169 = vld [vmem:[#allocation2 + $0x3f8] sm:$0xff]
    %v170 = vld [vmem:[%s2] sm:$0x3]
    %v172 = vlaneseq
    %v173 = vshrl.u32 %v172, 7
    %v174 = vsub.s32 0, %v173
    %v175 = vrot.slane %v170, %v174
    %v176 = vlaneseq
    %v177 = vshrl.u32 %v176, 7
    %v178 = vsub.s32 1, %v177
    %v179 = vrot.slane %v170, %v178
    %v190 = vunpack.c.l.b16 %v34
    %v191 = vunpack.c.h.b16 %v34
    %v192 = vunpack.c.l.b16 %v35
    %v193 = vunpack.c.h.b16 %v35
    %v194 = vunpack.c.l.b16 %v36
    %v195 = vunpack.c.h.b16 %v36
    %v196 = vunpack.c.l.b16 %v37
    %v197 = vunpack.c.h.b16 %v37
    %v198 = vunpack.c.l.b16 %v38
    %v199 = vunpack.c.h.b16 %v38
    %v200 = vunpack.c.l.b16 %v39
    %v201 = vunpack.c.h.b16 %v39
    %v202 = vunpack.c.l.b16 %v40
    %v203 = vunpack.c.h.b16 %v40
    %v204 = vunpack.c.l.b16 %v41
    %v205 = vunpack.c.h.b16 %v41
    %v206 = vpack.c.b16 %v198, %v190
    %v207 = vpack.c.b16 %v199, %v191
    %v208 = vpack.c.b16 %v200, %v192
    %v209 = vpack.c.b16 %v201, %v193
    %v210 = vpack.c.b16 %v202, %v194
    %v211 = vpack.c.b16 %v203, %v195
    %v212 = vpack.c.b16 %v204, %v196
    %v213 = vpack.c.b16 %v205, %v197
    %v350 = vunpack.c.l.b16 %v42
    %v351 = vunpack.c.h.b16 %v42
    %v352 = vunpack.c.l.b16 %v43
    %v353 = vunpack.c.h.b16 %v43
    %v354 = vunpack.c.l.b16 %v44
    %v355 = vunpack.c.h.b16 %v44
    %v356 = vunpack.c.l.b16 %v45
    %v357 = vunpack.c.h.b16 %v45
    %v358 = vunpack.c.l.b16 %v46
    %v359 = vunpack.c.h.b16 %v46
    %v360 = vunpack.c.l.b16 %v47
    %v361 = vunpack.c.h.b16 %v47
    %v362 = vunpack.c.l.b16 %v48
    %v363 = vunpack.c.h.b16 %v48
    %v364 = vunpack.c.l.b16 %v49
    %v365 = vunpack.c.h.b16 %v49
    %v366 = vunpack.c.l.b16 %v50
    %v367 = vunpack.c.h.b16 %v50
    %v368 = vunpack.c.l.b16 %v51
    %v369 = vunpack.c.h.b16 %v51
    %v370 = vunpack.c.l.b16 %v52
    %v371 = vunpack.c.h.b16 %v52
    %v372 = vunpack.c.l.b16 %v53
    %v373 = vunpack.c.h.b16 %v53
    %v374 = vunpack.c.l.b16 %v54
    %v375 = vunpack.c.h.b16 %v54
    %v376 = vunpack.c.l.b16 %v55
    %v377 = vunpack.c.h.b16 %v55
    %v378 = vunpack.c.l.b16 %v56
    %v379 = vunpack.c.h.b16 %v56
    %v380 = vunpack.c.l.b16 %v57
    %v381 = vunpack.c.h.b16 %v57
    %v382 = vunpack.c.l.b16 %v58
    %v383 = vunpack.c.h.b16 %v58
    %v384 = vunpack.c.l.b16 %v59
    %v385 = vunpack.c.h.b16 %v59
    %v386 = vunpack.c.l.b16 %v60
    %v387 = vunpack.c.h.b16 %v60
    %v388 = vunpack.c.l.b16 %v61
    %v389 = vunpack.c.h.b16 %v61
    %v390 = vunpack.c.l.b16 %v62
    %v391 = vunpack.c.h.b16 %v62
    %v392 = vunpack.c.l.b16 %v63
    %v393 = vunpack.c.h.b16 %v63
    %v394 = vunpack.c.l.b16 %v64
    %v395 = vunpack.c.h.b16 %v64
    %v396 = vunpack.c.l.b16 %v65
    %v397 = vunpack.c.h.b16 %v65
    %v398 = vunpack.c.l.b16 %v66
    %v399 = vunpack.c.h.b16 %v66
    %v400 = vunpack.c.l.b16 %v67
    %v401 = vunpack.c.h.b16 %v67
    %v402 = vunpack.c.l.b16 %v68
    %v403 = vunpack.c.h.b16 %v68
    %v404 = vunpack.c.l.b16 %v69
    %v405 = vunpack.c.h.b16 %v69
    %v406 = vunpack.c.l.b16 %v70
    %v407 = vunpack.c.h.b16 %v70
    %v408 = vunpack.c.l.b16 %v71
    %v409 = vunpack.c.h.b16 %v71
    %v410 = vunpack.c.l.b16 %v72
    %v411 = vunpack.c.h.b16 %v72
    %v412 = vunpack.c.l.b16 %v73
    %v413 = vunpack.c.h.b16 %v73
    %v414 = vunpack.c.l.b16 %v74
    %v415 = vunpack.c.h.b16 %v74
    %v416 = vunpack.c.l.b16 %v75
    %v417 = vunpack.c.h.b16 %v75
    %v418 = vunpack.c.l.b16 %v76
    %v419 = vunpack.c.h.b16 %v76
    %v420 = vunpack.c.l.b16 %v77
    %v421 = vunpack.c.h.b16 %v77
    %v422 = vunpack.c.l.b16 %v78
    %v423 = vunpack.c.h.b16 %v78
    %v424 = vunpack.c.l.b16 %v79
    %v425 = vunpack.c.h.b16 %v79
    %v426 = vunpack.c.l.b16 %v80
    %v427 = vunpack.c.h.b16 %v80
    %v428 = vunpack.c.l.b16 %v81
    %v429 = vunpack.c.h.b16 %v81
    %v430 = vunpack.c.l.b16 %v82
    %v431 = vunpack.c.h.b16 %v82
    %v432 = vunpack.c.l.b16 %v83
    %v433 = vunpack.c.h.b16 %v83
    %v434 = vunpack.c.l.b16 %v84
    %v435 = vunpack.c.h.b16 %v84
    %v436 = vunpack.c.l.b16 %v85
    %v437 = vunpack.c.h.b16 %v85
    %v438 = vunpack.c.l.b16 %v86
    %v439 = vunpack.c.h.b16 %v86
    %v440 = vunpack.c.l.b16 %v87
    %v441 = vunpack.c.h.b16 %v87
    %v442 = vunpack.c.l.b16 %v88
    %v443 = vunpack.c.h.b16 %v88
    %v444 = vunpack.c.l.b16 %v89
    %v445 = vunpack.c.h.b16 %v89
    %v446 = vunpack.c.l.b16 %v90
    %v447 = vunpack.c.h.b16 %v90
    %v448 = vunpack.c.l.b16 %v91
    %v449 = vunpack.c.h.b16 %v91
    %v450 = vunpack.c.l.b16 %v92
    %v451 = vunpack.c.h.b16 %v92
    %v452 = vunpack.c.l.b16 %v93
    %v453 = vunpack.c.h.b16 %v93
    %v454 = vunpack.c.l.b16 %v94
    %v455 = vunpack.c.h.b16 %v94
    %v456 = vunpack.c.l.b16 %v95
    %v457 = vunpack.c.h.b16 %v95
    %v458 = vunpack.c.l.b16 %v96
    %v459 = vunpack.c.h.b16 %v96
    %v460 = vunpack.c.l.b16 %v97
    %v461 = vunpack.c.h.b16 %v97
    %v462 = vunpack.c.l.b16 %v98
    %v463 = vunpack.c.h.b16 %v98
    %v464 = vunpack.c.l.b16 %v99
    %v465 = vunpack.c.h.b16 %v99
    %v466 = vunpack.c.l.b16 %v100
    %v467 = vunpack.c.h.b16 %v100
    %v468 = vunpack.c.l.b16 %v101
    %v469 = vunpack.c.h.b16 %v101
    %v470 = vunpack.c.l.b16 %v102
    %v471 = vunpack.c.h.b16 %v102
    %v472 = vunpack.c.l.b16 %v103
    %v473 = vunpack.c.h.b16 %v103
    %v474 = vunpack.c.l.b16 %v104
    %v475 = vunpack.c.h.b16 %v104
    %v476 = vunpack.c.l.b16 %v105
    %v477 = vunpack.c.h.b16 %v105
    %v478 = vunpack.c.l.b16 %v106
    %v479 = vunpack.c.h.b16 %v106
    %v480 = vunpack.c.l.b16 %v107
    %v481 = vunpack.c.h.b16 %v107
    %v482 = vunpack.c.l.b16 %v108
    %v483 = vunpack.c.h.b16 %v108
    %v484 = vunpack.c.l.b16 %v109
    %v485 = vunpack.c.h.b16 %v109
    %v486 = vunpack.c.l.b16 %v110
    %v487 = vunpack.c.h.b16 %v110
    %v488 = vunpack.c.l.b16 %v111
    %v489 = vunpack.c.h.b16 %v111
    %v490 = vunpack.c.l.b16 %v112
    %v491 = vunpack.c.h.b16 %v112
    %v492 = vunpack.c.l.b16 %v113
    %v493 = vunpack.c.h.b16 %v113
    %v494 = vunpack.c.l.b16 %v114
    %v495 = vunpack.c.h.b16 %v114
    %v496 = vunpack.c.l.b16 %v115
    %v497 = vunpack.c.h.b16 %v115
    %v498 = vunpack.c.l.b16 %v116
    %v499 = vunpack.c.h.b16 %v116
    %v500 = vunpack.c.l.b16 %v117
    %v501 = vunpack.c.h.b16 %v117
    %v502 = vunpack.c.l.b16 %v118
    %v503 = vunpack.c.h.b16 %v118
    %v504 = vunpack.c.l.b16 %v119
    %v505 = vunpack.c.h.b16 %v119
    %v506 = vunpack.c.l.b16 %v120
    %v507 = vunpack.c.h.b16 %v120
    %v508 = vunpack.c.l.b16 %v121
    %v509 = vunpack.c.h.b16 %v121
    %v510 = vunpack.c.l.b16 %v122
    %v511 = vunpack.c.h.b16 %v122
    %v512 = vunpack.c.l.b16 %v123
    %v513 = vunpack.c.h.b16 %v123
    %v514 = vunpack.c.l.b16 %v124
    %v515 = vunpack.c.h.b16 %v124
    %v516 = vunpack.c.l.b16 %v125
    %v517 = vunpack.c.h.b16 %v125
    %v518 = vunpack.c.l.b16 %v126
    %v519 = vunpack.c.h.b16 %v126
    %v520 = vunpack.c.l.b16 %v127
    %v521 = vunpack.c.h.b16 %v127
    %v522 = vunpack.c.l.b16 %v128
    %v523 = vunpack.c.h.b16 %v128
    %v524 = vunpack.c.l.b16 %v129
    %v525 = vunpack.c.h.b16 %v129
    %v526 = vunpack.c.l.b16 %v130
    %v527 = vunpack.c.h.b16 %v130
    %v528 = vunpack.c.l.b16 %v131
    %v529 = vunpack.c.h.b16 %v131
    %v530 = vunpack.c.l.b16 %v132
    %v531 = vunpack.c.h.b16 %v132
    %v532 = vunpack.c.l.b16 %v133
    %v533 = vunpack.c.h.b16 %v133
    %v534 = vunpack.c.l.b16 %v134
    %v535 = vunpack.c.h.b16 %v134
    %v536 = vunpack.c.l.b16 %v135
    %v537 = vunpack.c.h.b16 %v135
    %v538 = vunpack.c.l.b16 %v136
    %v539 = vunpack.c.h.b16 %v136
    %v540 = vunpack.c.l.b16 %v137
    %v541 = vunpack.c.h.b16 %v137
    %v542 = vunpack.c.l.b16 %v138
    %v543 = vunpack.c.h.b16 %v138
    %v544 = vunpack.c.l.b16 %v139
    %v545 = vunpack.c.h.b16 %v139
    %v546 = vunpack.c.l.b16 %v140
    %v547 = vunpack.c.h.b16 %v140
    %v548 = vunpack.c.l.b16 %v141
    %v549 = vunpack.c.h.b16 %v141
    %v550 = vunpack.c.l.b16 %v142
    %v551 = vunpack.c.h.b16 %v142
    %v552 = vunpack.c.l.b16 %v143
    %v553 = vunpack.c.h.b16 %v143
    %v554 = vunpack.c.l.b16 %v144
    %v555 = vunpack.c.h.b16 %v144
    %v556 = vunpack.c.l.b16 %v145
    %v557 = vunpack.c.h.b16 %v145
    %v558 = vunpack.c.l.b16 %v146
    %v559 = vunpack.c.h.b16 %v146
    %v560 = vunpack.c.l.b16 %v147
    %v561 = vunpack.c.h.b16 %v147
    %v562 = vunpack.c.l.b16 %v148
    %v563 = vunpack.c.h.b16 %v148
    %v564 = vunpack.c.l.b16 %v149
    %v565 = vunpack.c.h.b16 %v149
    %v566 = vunpack.c.l.b16 %v150
    %v567 = vunpack.c.h.b16 %v150
    %v568 = vunpack.c.l.b16 %v151
    %v569 = vunpack.c.h.b16 %v151
    %v570 = vunpack.c.l.b16 %v152
    %v571 = vunpack.c.h.b16 %v152
    %v572 = vunpack.c.l.b16 %v153
    %v573 = vunpack.c.h.b16 %v153
    %v574 = vunpack.c.l.b16 %v154
    %v575 = vunpack.c.h.b16 %v154
    %v576 = vunpack.c.l.b16 %v155
    %v577 = vunpack.c.h.b16 %v155
    %v578 = vunpack.c.l.b16 %v156
    %v579 = vunpack.c.h.b16 %v156
    %v580 = vunpack.c.l.b16 %v157
    %v581 = vunpack.c.h.b16 %v157
    %v582 = vunpack.c.l.b16 %v158
    %v583 = vunpack.c.h.b16 %v158
    %v584 = vunpack.c.l.b16 %v159
    %v585 = vunpack.c.h.b16 %v159
    %v586 = vunpack.c.l.b16 %v160
    %v587 = vunpack.c.h.b16 %v160
    %v588 = vunpack.c.l.b16 %v161
    %v589 = vunpack.c.h.b16 %v161
    %v590 = vunpack.c.l.b16 %v162
    %v591 = vunpack.c.h.b16 %v162
    %v592 = vunpack.c.l.b16 %v163
    %v593 = vunpack.c.h.b16 %v163
    %v594 = vunpack.c.l.b16 %v164
    %v595 = vunpack.c.h.b16 %v164
    %v596 = vunpack.c.l.b16 %v165
    %v597 = vunpack.c.h.b16 %v165
    %v598 = vunpack.c.l.b16 %v166
    %v599 = vunpack.c.h.b16 %v166
    %v600 = vunpack.c.l.b16 %v167
    %v601 = vunpack.c.h.b16 %v167
    %v602 = vunpack.c.l.b16 %v168
    %v603 = vunpack.c.h.b16 %v168
    %v604 = vunpack.c.l.b16 %v169
    %v605 = vunpack.c.h.b16 %v169
    %v606 = vpack.c.b16 %v352, %v350
    %v607 = vpack.c.b16 %v353, %v351
    %v608 = vpack.c.b16 %v356, %v354
    %v609 = vpack.c.b16 %v357, %v355
    %v610 = vpack.c.b16 %v360, %v358
    %v611 = vpack.c.b16 %v361, %v359
    %v612 = vpack.c.b16 %v364, %v362
    %v613 = vpack.c.b16 %v365, %v363
    %v614 = vpack.c.b16 %v368, %v366
    %v615 = vpack.c.b16 %v369, %v367
    %v616 = vpack.c.b16 %v372, %v370
    %v617 = vpack.c.b16 %v373, %v371
    %v618 = vpack.c.b16 %v376, %v374
    %v619 = vpack.c.b16 %v377, %v375
    %v620 = vpack.c.b16 %v380, %v378
    %v621 = vpack.c.b16 %v381, %v379
    %v622 = vpack.c.b16 %v384, %v382
    %v623 = vpack.c.b16 %v385, %v383
    %v624 = vpack.c.b16 %v388, %v386
    %v625 = vpack.c.b16 %v389, %v387
    %v626 = vpack.c.b16 %v392, %v390
    %v627 = vpack.c.b16 %v393, %v391
    %v628 = vpack.c.b16 %v396, %v394
    %v629 = vpack.c.b16 %v397, %v395
    %v630 = vpack.c.b16 %v400, %v398
    %v631 = vpack.c.b16 %v401, %v399
    %v632 = vpack.c.b16 %v404, %v402
    %v633 = vpack.c.b16 %v405, %v403
    %v634 = vpack.c.b16 %v408, %v406
    %v635 = vpack.c.b16 %v409, %v407
    %v636 = vpack.c.b16 %v412, %v410
    %v637 = vpack.c.b16 %v413, %v411
    %v638 = vpack.c.b16 %v416, %v414
    %v639 = vpack.c.b16 %v417, %v415
    %v640 = vpack.c.b16 %v420, %v418
    %v641 = vpack.c.b16 %v421, %v419
    %v642 = vpack.c.b16 %v424, %v422
    %v643 = vpack.c.b16 %v425, %v423
    %v644 = vpack.c.b16 %v428, %v426
    %v645 = vpack.c.b16 %v429, %v427
    %v646 = vpack.c.b16 %v432, %v430
    %v647 = vpack.c.b16 %v433, %v431
    %v648 = vpack.c.b16 %v436, %v434
    %v649 = vpack.c.b16 %v437, %v435
    %v650 = vpack.c.b16 %v440, %v438
    %v651 = vpack.c.b16 %v441, %v439
    %v652 = vpack.c.b16 %v444, %v442
    %v653 = vpack.c.b16 %v445, %v443
    %v654 = vpack.c.b16 %v448, %v446
    %v655 = vpack.c.b16 %v449, %v447
    %v656 = vpack.c.b16 %v452, %v450
    %v657 = vpack.c.b16 %v453, %v451
    %v658 = vpack.c.b16 %v456, %v454
    %v659 = vpack.c.b16 %v457, %v455
    %v660 = vpack.c.b16 %v460, %v458
    %v661 = vpack.c.b16 %v461, %v459
    %v662 = vpack.c.b16 %v464, %v462
    %v663 = vpack.c.b16 %v465, %v463
    %v664 = vpack.c.b16 %v468, %v466
    %v665 = vpack.c.b16 %v469, %v467
    %v666 = vpack.c.b16 %v472, %v470
    %v667 = vpack.c.b16 %v473, %v471
    %v668 = vpack.c.b16 %v476, %v474
    %v669 = vpack.c.b16 %v477, %v475
    %v670 = vpack.c.b16 %v480, %v478
    %v671 = vpack.c.b16 %v481, %v479
    %v672 = vpack.c.b16 %v484, %v482
    %v673 = vpack.c.b16 %v485, %v483
    %v674 = vpack.c.b16 %v488, %v486
    %v675 = vpack.c.b16 %v489, %v487
    %v676 = vpack.c.b16 %v492, %v490
    %v677 = vpack.c.b16 %v493, %v491
    %v678 = vpack.c.b16 %v496, %v494
    %v679 = vpack.c.b16 %v497, %v495
    %v680 = vpack.c.b16 %v500, %v498
    %v681 = vpack.c.b16 %v501, %v499
    %v682 = vpack.c.b16 %v504, %v502
    %v683 = vpack.c.b16 %v505, %v503
    %v684 = vpack.c.b16 %v508, %v506
    %v685 = vpack.c.b16 %v509, %v507
    %v686 = vpack.c.b16 %v512, %v510
    %v687 = vpack.c.b16 %v513, %v511
    %v688 = vpack.c.b16 %v516, %v514
    %v689 = vpack.c.b16 %v517, %v515
    %v690 = vpack.c.b16 %v520, %v518
    %v691 = vpack.c.b16 %v521, %v519
    %v692 = vpack.c.b16 %v524, %v522
    %v693 = vpack.c.b16 %v525, %v523
    %v694 = vpack.c.b16 %v528, %v526
    %v695 = vpack.c.b16 %v529, %v527
    %v696 = vpack.c.b16 %v532, %v530
    %v697 = vpack.c.b16 %v533, %v531
    %v698 = vpack.c.b16 %v536, %v534
    %v699 = vpack.c.b16 %v537, %v535
    %v700 = vpack.c.b16 %v540, %v538
    %v701 = vpack.c.b16 %v541, %v539
    %v702 = vpack.c.b16 %v544, %v542
    %v703 = vpack.c.b16 %v545, %v543
    %v704 = vpack.c.b16 %v548, %v546
    %v705 = vpack.c.b16 %v549, %v547
    %v706 = vpack.c.b16 %v552, %v550
    %v707 = vpack.c.b16 %v553, %v551
    %v708 = vpack.c.b16 %v556, %v554
    %v709 = vpack.c.b16 %v557, %v555
    %v710 = vpack.c.b16 %v560, %v558
    %v711 = vpack.c.b16 %v561, %v559
    %v712 = vpack.c.b16 %v564, %v562
    %v713 = vpack.c.b16 %v565, %v563
    %v714 = vpack.c.b16 %v568, %v566
    %v715 = vpack.c.b16 %v569, %v567
    %v716 = vpack.c.b16 %v572, %v570
    %v717 = vpack.c.b16 %v573, %v571
    %v718 = vpack.c.b16 %v576, %v574
    %v719 = vpack.c.b16 %v577, %v575
    %v720 = vpack.c.b16 %v580, %v578
    %v721 = vpack.c.b16 %v581, %v579
    %v722 = vpack.c.b16 %v584, %v582
    %v723 = vpack.c.b16 %v585, %v583
    %v724 = vpack.c.b16 %v588, %v586
    %v725 = vpack.c.b16 %v589, %v587
    %v726 = vpack.c.b16 %v592, %v590
    %v727 = vpack.c.b16 %v593, %v591
    %v728 = vpack.c.b16 %v596, %v594
    %v729 = vpack.c.b16 %v597, %v595
    %v730 = vpack.c.b16 %v600, %v598
    %v731 = vpack.c.b16 %v601, %v599
    %v732 = vpack.c.b16 %v604, %v602
    %v733 = vpack.c.b16 %v605, %v603
    %862 = vmatprep.subr.bf16.mxu0 %v621
    %863 = vmatpush1.bf16.msra.mxu0 %v620
    %864 = vmatprep.subr.bf16.mxu0 %v619
    %865 = vmatpush1.bf16.msra.mxu0 %v618
    %866 = vmatprep.subr.bf16.mxu0 %v617
    %867 = vmatpush1.bf16.msra.mxu0 %v616
    %868 = vmatprep.subr.bf16.mxu0 %v615
    %869 = vmatpush1.bf16.msra.mxu0 %v614
    %870 = vmatprep.subr.bf16.mxu0 %v613
    %871 = vmatpush1.bf16.msra.mxu0 %v612
    %872 = vmatprep.subr.bf16.mxu0 %v611
    %873 = vmatpush1.bf16.msra.mxu0 %v610
    %874 = vmatprep.subr.bf16.mxu0 %v609
    %875 = vmatpush1.bf16.msra.mxu0 %v608
    %876 = vmatprep.subr.bf16.mxu0 %v607
    %877 = vmatpush1.bf16.msra.mxu0 %v606
    %878 = vmatprep.subr.bf16.mxu0 %v637
    %879 = vmatpush2.bf16.msra.mxu0 %v636
    %880 = vmatprep.subr.bf16.mxu0 %v635
    %881 = vmatpush2.bf16.msra.mxu0 %v634
    %882 = vmatprep.subr.bf16.mxu0 %v633
    %883 = vmatpush2.bf16.msra.mxu0 %v632
    %884 = vmatprep.subr.bf16.mxu0 %v631
    %885 = vmatpush2.bf16.msra.mxu0 %v630
    %886 = vmatprep.subr.bf16.mxu0 %v629
    %887 = vmatpush2.bf16.msra.mxu0 %v628
    %888 = vmatprep.subr.bf16.mxu0 %v627
    %889 = vmatpush2.bf16.msra.mxu0 %v626
    %890 = vmatprep.subr.bf16.mxu0 %v625
    %891 = vmatpush2.bf16.msra.mxu0 %v624
    %892 = vmatprep.subr.bf16.mxu0 %v623
    %893 = vmatpush2.bf16.msra.mxu0 %v622
    %894 = vmatprep.mubr.bf16.mxu0 %v207
    %895 = vmatmul.mubr.bf16.gmra.mxu0 %v206
    %v896 = vpop.f32.mrf.mxu0
    %v897 = vadd.f32 %v175, %v896
    %v898 = vpop.f32.mrf.mxu0
    %v899 = vadd.f32 %v179, %v898
    %v900 = vpop.f32.mrf.mxu0
    %v901 = vadd.f32 %v175, %v900
    %v902 = vpop.f32.mrf.mxu0
    %v903 = vadd.f32 %v179, %v902
    %904 = vdwg.mxu0
    %905 = vmatprep.subr.bf16.mxu0 %v653
    %906 = vmatpush1.bf16.msra.mxu0 %v652
    %907 = vmatprep.subr.bf16.mxu0 %v651
    %908 = vmatpush1.bf16.msra.mxu0 %v650
    %909 = vmatprep.subr.bf16.mxu0 %v649
    %910 = vmatpush1.bf16.msra.mxu0 %v648
    %911 = vmatprep.subr.bf16.mxu0 %v647
    %912 = vmatpush1.bf16.msra.mxu0 %v646
    %913 = vmatprep.subr.bf16.mxu0 %v645
    %914 = vmatpush1.bf16.msra.mxu0 %v644
    %915 = vmatprep.subr.bf16.mxu0 %v643
    %916 = vmatpush1.bf16.msra.mxu0 %v642
    %917 = vmatprep.subr.bf16.mxu0 %v641
    %918 = vmatpush1.bf16.msra.mxu0 %v640
    %919 = vmatprep.subr.bf16.mxu0 %v639
    %920 = vmatpush1.bf16.msra.mxu0 %v638
    %921 = vmatprep.subr.bf16.mxu0 %v669
    %922 = vmatpush2.bf16.msra.mxu0 %v668
    %923 = vmatprep.subr.bf16.mxu0 %v667
    %924 = vmatpush2.bf16.msra.mxu0 %v666
    %925 = vmatprep.subr.bf16.mxu0 %v665
    %926 = vmatpush2.bf16.msra.mxu0 %v664
    %927 = vmatprep.subr.bf16.mxu0 %v663
    %928 = vmatpush2.bf16.msra.mxu0 %v662
    %929 = vmatprep.subr.bf16.mxu0 %v661
    %930 = vmatpush2.bf16.msra.mxu0 %v660
    %931 = vmatprep.subr.bf16.mxu0 %v659
    %932 = vmatpush2.bf16.msra.mxu0 %v658
    %933 = vmatprep.subr.bf16.mxu0 %v657
    %934 = vmatpush2.bf16.msra.mxu0 %v656
    %935 = vmatprep.subr.bf16.mxu0 %v655
    %936 = vmatpush2.bf16.msra.mxu0 %v654
    %937 = vmatprep.mubr.bf16.mxu0 %v209
    %938 = vmatmul.mubr.bf16.gmra.mxu0 %v208
    %v939 = vpop.f32.mrf.mxu0
    %v940 = vadd.f32 %v897, %v939
    %v941 = vpop.f32.mrf.mxu0
    %v942 = vadd.f32 %v899, %v941
    %v943 = vpop.f32.mrf.mxu0
    %v944 = vadd.f32 %v901, %v943
    %v945 = vpop.f32.mrf.mxu0
    %v946 = vadd.f32 %v903, %v945
    %947 = vdwg.mxu0
    %948 = vmatprep.subr.bf16.mxu0 %v685
    %949 = vmatpush1.bf16.msra.mxu0 %v684
    %950 = vmatprep.subr.bf16.mxu0 %v683
    %951 = vmatpush1.bf16.msra.mxu0 %v682
    %952 = vmatprep.subr.bf16.mxu0 %v681
    %953 = vmatpush1.bf16.msra.mxu0 %v680
    %954 = vmatprep.subr.bf16.mxu0 %v679
    %955 = vmatpush1.bf16.msra.mxu0 %v678
    %956 = vmatprep.subr.bf16.mxu0 %v677
    %957 = vmatpush1.bf16.msra.mxu0 %v676
    %958 = vmatprep.subr.bf16.mxu0 %v675
    %959 = vmatpush1.bf16.msra.mxu0 %v674
    %960 = vmatprep.subr.bf16.mxu0 %v673
    %961 = vmatpush1.bf16.msra.mxu0 %v672
    %962 = vmatprep.subr.bf16.mxu0 %v671
    %963 = vmatpush1.bf16.msra.mxu0 %v670
    %964 = vmatprep.subr.bf16.mxu0 %v701
    %965 = vmatpush2.bf16.msra.mxu0 %v700
    %966 = vmatprep.subr.bf16.mxu0 %v699
    %967 = vmatpush2.bf16.msra.mxu0 %v698
    %968 = vmatprep.subr.bf16.mxu0 %v697
    %969 = vmatpush2.bf16.msra.mxu0 %v696
    %970 = vmatprep.subr.bf16.mxu0 %v695
    %971 = vmatpush2.bf16.msra.mxu0 %v694
    %972 = vmatprep.subr.bf16.mxu0 %v693
    %973 = vmatpush2.bf16.msra.mxu0 %v692
    %974 = vmatprep.subr.bf16.mxu0 %v691
    %975 = vmatpush2.bf16.msra.mxu0 %v690
    %976 = vmatprep.subr.bf16.mxu0 %v689
    %977 = vmatpush2.bf16.msra.mxu0 %v688
    %978 = vmatprep.subr.bf16.mxu0 %v687
    %979 = vmatpush2.bf16.msra.mxu0 %v686
    %980 = vmatprep.mubr.bf16.mxu0 %v211
    %981 = vmatmul.mubr.bf16.gmra.mxu0 %v210
    %v982 = vpop.f32.mrf.mxu0
    %v983 = vadd.f32 %v940, %v982
    %v984 = vpop.f32.mrf.mxu0
    %v985 = vadd.f32 %v942, %v984
    %v986 = vpop.f32.mrf.mxu0
    %v987 = vadd.f32 %v944, %v986
    %v988 = vpop.f32.mrf.mxu0
    %v989 = vadd.f32 %v946, %v988
    %990 = vdwg.mxu0
    %991 = vmatprep.subr.bf16.mxu0 %v717
    %992 = vmatpush1.bf16.msra.mxu0 %v716
    %993 = vmatprep.subr.bf16.mxu0 %v715
    %994 = vmatpush1.bf16.msra.mxu0 %v714
    %995 = vmatprep.subr.bf16.mxu0 %v713
    %996 = vmatpush1.bf16.msra.mxu0 %v712
    %997 = vmatprep.subr.bf16.mxu0 %v711
    %998 = vmatpush1.bf16.msra.mxu0 %v710
    %999 = vmatprep.subr.bf16.mxu0 %v709
    %1000 = vmatpush1.bf16.msra.mxu0 %v708
    %1001 = vmatprep.subr.bf16.mxu0 %v707
    %1002 = vmatpush1.bf16.msra.mxu0 %v706
    %1003 = vmatprep.subr.bf16.mxu0 %v705
    %1004 = vmatpush1.bf16.msra.mxu0 %v704
    %1005 = vmatprep.subr.bf16.mxu0 %v703
    %1006 = vmatpush1.bf16.msra.mxu0 %v702
    %1007 = vmatprep.subr.bf16.mxu0 %v733
    %1008 = vmatpush2.bf16.msra.mxu0 %v732
    %1009 = vmatprep.subr.bf16.mxu0 %v731
    %1010 = vmatpush2.bf16.msra.mxu0 %v730
    %1011 = vmatprep.subr.bf16.mxu0 %v729
    %1012 = vmatpush2.bf16.msra.mxu0 %v728
    %1013 = vmatprep.subr.bf16.mxu0 %v727
    %1014 = vmatpush2.bf16.msra.mxu0 %v726
    %1015 = vmatprep.subr.bf16.mxu0 %v725
    %1016 = vmatpush2.bf16.msra.mxu0 %v724
    %1017 = vmatprep.subr.bf16.mxu0 %v723
    %1018 = vmatpush2.bf16.msra.mxu0 %v722
    %1019 = vmatprep.subr.bf16.mxu0 %v721
    %1020 = vmatpush2.bf16.msra.mxu0 %v720
    %1021 = vmatprep.subr.bf16.mxu0 %v719
    %1022 = vmatpush2.bf16.msra.mxu0 %v718
    %1023 = vmatprep.mubr.bf16.mxu0 %v213
    %1024 = vmatmul.mubr.bf16.gmra.mxu0 %v212
    %v1025 = vpop.f32.mrf.mxu0
    %v1026 = vadd.f32 %v983, %v1025
    %v1027 = vpop.f32.mrf.mxu0
    %v1028 = vadd.f32 %v985, %v1027
    %v1029 = vpop.f32.mrf.mxu0
    %v1030 = vadd.f32 %v987, %v1029
    %v1031 = vpop.f32.mrf.mxu0
    %v1032 = vadd.f32 %v989, %v1031
    %1033 = vdwg.mxu0
    %v1034 = vld [vmem:[%s3] sm:$0xff]
    %v1035 = vld [vmem:[%s3 + $0x8] sm:$0xff]
    %v1036 = vld [vmem:[%s3 + $0x10] sm:$0xff]
    %v1037 = vld [vmem:[%s3 + $0x18] sm:$0xff]
    %v1038 = vld [vmem:[%s3 + $0x20] sm:$0xff]
    %v1039 = vld [vmem:[%s3 + $0x28] sm:$0xff]
    %v1040 = vld [vmem:[%s3 + $0x30] sm:$0xff]
    %v1041 = vld [vmem:[%s3 + $0x38] sm:$0xff]
    %v1042 = vld [vmem:[%s3 + $0x40] sm:$0xff]
    %v1043 = vld [vmem:[%s3 + $0x48] sm:$0xff]
    %v1044 = vld [vmem:[%s3 + $0x50] sm:$0xff]
    %v1045 = vld [vmem:[%s3 + $0x58] sm:$0xff]
    %v1046 = vld [vmem:[%s3 + $0x60] sm:$0xff]
    %v1047 = vld [vmem:[%s3 + $0x68] sm:$0xff]
    %v1048 = vld [vmem:[%s3 + $0x70] sm:$0xff]
    %v1049 = vld [vmem:[%s3 + $0x78] sm:$0xff]
    %v1050 = vld [vmem:[%s3 + $0x80] sm:$0xff]
    %v1051 = vld [vmem:[%s3 + $0x88] sm:$0xff]
    %v1052 = vld [vmem:[%s3 + $0x90] sm:$0xff]
    %v1053 = vld [vmem:[%s3 + $0x98] sm:$0xff]
    %v1054 = vld [vmem:[%s3 + $0xa0] sm:$0xff]
    %v1055 = vld [vmem:[%s3 + $0xa8] sm:$0xff]
    %v1056 = vld [vmem:[%s3 + $0xb0] sm:$0xff]
    %v1057 = vld [vmem:[%s3 + $0xb8] sm:$0xff]
    %v1058 = vld [vmem:[%s3 + $0xc0] sm:$0xff]
    %v1059 = vld [vmem:[%s3 + $0xc8] sm:$0xff]
    %v1060 = vld [vmem:[%s3 + $0xd0] sm:$0xff]
    %v1061 = vld [vmem:[%s3 + $0xd8] sm:$0xff]
    %v1062 = vld [vmem:[%s3 + $0xe0] sm:$0xff]
    %v1063 = vld [vmem:[%s3 + $0xe8] sm:$0xff]
    %v1064 = vld [vmem:[%s3 + $0xf0] sm:$0xff]
    %v1065 = vld [vmem:[%s3 + $0xf8] sm:$0xff]
    %v1066 = vld [vmem:[%s4] sm:$0x1]
    %v1068 = vlaneseq
    %v1069 = vshrl.u32 %v1068, 7
    %v1070 = vsub.s32 0, %v1069
    %v1071 = vrot.slane %v1066, %v1070
    %1073 = vmatprep.subr.mxu0 0.0
    %1074 = vmatpush1.msra.mxu0 %v1049
    %1075 = vmatprep.subr.mxu0 0.0
    %1076 = vmatpush1.msra.mxu0 %v1048
    %1077 = vmatprep.subr.mxu0 0.0
    %1078 = vmatpush1.msra.mxu0 %v1047
    %1079 = vmatprep.subr.mxu0 0.0
    %1080 = vmatpush1.msra.mxu0 %v1046
    %1081 = vmatprep.subr.mxu0 0.0
    %1082 = vmatpush1.msra.mxu0 %v1045
    %1083 = vmatprep.subr.mxu0 0.0
    %1084 = vmatpush1.msra.mxu0 %v1044
    %1085 = vmatprep.subr.mxu0 0.0
    %1086 = vmatpush1.msra.mxu0 %v1043
    %1087 = vmatprep.subr.mxu0 0.0
    %1088 = vmatpush1.msra.mxu0 %v1042
    %1089 = vmatprep.subr.mxu0 0.0
    %1090 = vmatpush1.msra.mxu0 %v1041
    %1091 = vmatprep.subr.mxu0 0.0
    %1092 = vmatpush1.msra.mxu0 %v1040
    %1093 = vmatprep.subr.mxu0 0.0
    %1094 = vmatpush1.msra.mxu0 %v1039
    %1095 = vmatprep.subr.mxu0 0.0
    %1096 = vmatpush1.msra.mxu0 %v1038
    %1097 = vmatprep.subr.mxu0 0.0
    %1098 = vmatpush1.msra.mxu0 %v1037
    %1099 = vmatprep.subr.mxu0 0.0
    %1100 = vmatpush1.msra.mxu0 %v1036
    %1101 = vmatprep.subr.mxu0 0.0
    %1102 = vmatpush1.msra.mxu0 %v1035
    %1103 = vmatprep.subr.mxu0 0.0
    %1104 = vmatpush1.msra.mxu0 %v1034
    %1105 = vmatprep.subr.mxu0 0.0
    %1106 = vmatpush2.msra.mxu0 %v1065
    %1107 = vmatprep.subr.mxu0 0.0
    %1108 = vmatpush2.msra.mxu0 %v1064
    %1109 = vmatprep.subr.mxu0 0.0
    %1110 = vmatpush2.msra.mxu0 %v1063
    %1111 = vmatprep.subr.mxu0 0.0
    %1112 = vmatpush2.msra.mxu0 %v1062
    %1113 = vmatprep.subr.mxu0 0.0
    %1114 = vmatpush2.msra.mxu0 %v1061
    %1115 = vmatprep.subr.mxu0 0.0
    %1116 = vmatpush2.msra.mxu0 %v1060
    %1117 = vmatprep.subr.mxu0 0.0
    %1118 = vmatpush2.msra.mxu0 %v1059
    %1119 = vmatprep.subr.mxu0 0.0
    %1120 = vmatpush2.msra.mxu0 %v1058
    %1121 = vmatprep.subr.mxu0 0.0
    %1122 = vmatpush2.msra.mxu0 %v1057
    %1123 = vmatprep.subr.mxu0 0.0
    %1124 = vmatpush2.msra.mxu0 %v1056
    %1125 = vmatprep.subr.mxu0 0.0
    %1126 = vmatpush2.msra.mxu0 %v1055
    %1127 = vmatprep.subr.mxu0 0.0
    %1128 = vmatpush2.msra.mxu0 %v1054
    %1129 = vmatprep.subr.mxu0 0.0
    %1130 = vmatpush2.msra.mxu0 %v1053
    %1131 = vmatprep.subr.mxu0 0.0
    %1132 = vmatpush2.msra.mxu0 %v1052
    %1133 = vmatprep.subr.mxu0 0.0
    %1134 = vmatpush2.msra.mxu0 %v1051
    %1135 = vmatprep.subr.mxu0 0.0
    %1136 = vmatpush2.msra.mxu0 %v1050
    %1137 = vmatprep.mubr.f32.mxu0 %v1028
    %1138 = vmatmul.mubr.f32.gmra.mxu0 %v1026
    %v1139 = vpop.f32.mrf.mxu0
    %v1140 = vadd.f32 %v1071, %v1139
    %v1141 = vpop.f32.mrf.mxu0
    %1142 = vmatprep.mubr.f32.mxu0 %v1032
    %1143 = vmatmul.mubr.f32.gmra.mxu0 %v1030
    %v1144 = vpop.f32.mrf.mxu0
    %v1145 = vadd.f32 %v1071, %v1144
    %v1146 = vpop.f32.mrf.mxu0
    %1147 = vdwg.mxu0
    %vm1148 = vcmask 31744
    %v1149 = vsel %vm1148, %v1140, -inf
    %1150 = vmax.xlane.f32.xlu0 %v1149
    %v1151 = vpop.xlane.xlu0 %1150
    %v1152 = vsel %vm1148, %v1145, -inf
    %1153 = vmax.xlane.f32.xlu0 %v1152
    %v1154 = vpop.xlane.xlu0 %1153
    %v1155 = vsub.f32 %v1140, %v1151
    %v1156 = vsub.f32 %v1145, %v1154
    %v1157 = vmul.f32 %v1155, 1.442695
    %v1158 = vpow.pop %v1157
    %v1159 = vmul.f32 %v1156, 1.442695
    %v1160 = vpow.pop %v1159
    %v1161 = vsel %vm1148, %v1158, 0.0
    %1162 = vadd.xlane.f32.xlu0 %v1161
    %v1163 = vpop.xlane.xlu0 %1162
    %v1164 = vsel %vm1148, %v1160, 0.0
    %1165 = vadd.xlane.f32.xlu0 %v1164
    %v1166 = vpop.xlane.xlu0 %1165
    %v1167 = vrcp.pop %v1163
    %v1168 = vmul.f32 %v1158, %v1167
    %v1169 = vrcp.pop %v1166
    %v1170 = vmul.f32 %v1160, %v1169
    %1171 = vst.msk [vmem:[%s5] sm:$0xff] %vm1148, %v1168
    %1172 = vst.msk [vmem:[%s5 + $0x8] sm:$0xff] %vm1148, %v1170
    // Predicated region
    $region26: #{_fwd.1} parent=1 // pred_check
      _
    $region27: #{_fwd.1} parent=1 // pred_check_branch
      %1174 = sbr.rel (0) target = $region29
    $region28: #{_fwd.1} parent=1 // pred_region
      _
    $region29: #{_fwd.1} parent=1 // pred_fallthru
      _
    // Predicated region
    $region30: #{_fwd.1} parent=1 // pred_check
      _
    $region31: #{_fwd.1} parent=1 // pred_check_branch
      %1176 = sbr.rel (0) target = $region33
    $region32: #{_fwd.1} parent=1 // pred_region
      _
    $region33: #{_fwd.1} parent=1 // pred_fallthru
      _
    %1177 = vsyncpa [#allocation3], 1

</llo_original>
